<compile_context>
chip_gen: v6e
topology: v6e:2x2x1
jax: 0.10.0
libtpu: 0.0.40
codegen_flags: <defaults>
</compile_context>

<pallas_src>
import functools

import jax
import jax.numpy as jnp
import numpy as np
from jax.experimental import pallas as pl
from jax.experimental.pallas import tpu as pltpu


_OUT_SUB = 8      # sublane rows of each per-core partial-output block
_OUT_LANE = 128   # lane width of each per-core partial-output block (lane-dense)


def _round_up(x, m):
    return ((x + m - 1) // m) * m


def _cdiv(a, b):
    return -(-a // b)


def _core_split():
    """Leading 'parallel' grid axis size: 2 on multi-TensorCore chips, else 1."""
    try:
        kind = jax.devices()[0].device_kind.lower()
    except Exception:
        return 1
    for tag in ("v4", "v5p", "v7", "7x"):
        if tag in kind:
            return 2
    return 1


def _semi_loss_kernel(active_ref, remap_ref, o_ref, oc_ref, y_ref, bm_ref, cm_ref,
                      out_ref, acc_ref, *, threshold, inv_temperature, nbr, tb, tc):
    core = pl.program_id(0)
    i = pl.program_id(1)
    j = pl.program_id(2)
    slot = core * nbr + i

    # Per-core-slice accumulator init (fires once per value of the parallel axis).
    @pl.when((i == 0) & (j == 0))
    def _init():
        acc_ref[...] = jnp.zeros_like(acc_ref)

    # Skip compute for row blocks with no active row.  (Their DMAs were already
    # redirected to the previously used block index via the remap table.)
    @pl.when(active_ref[slot] != 0)
    def _compute():
        o = o_ref[...]            # (tb, tc) model output probabilities
        oc = oc_ref[...]          # (tb, tc) consistency output
        y = y_ref[...]            # (tb, tc) labels in [0, 1]

        # BCE per element; PyTorch BCELoss clamps log terms at -100.
        # Two-log form kept so soft labels stay exact (a single-log rewrite is
        # only valid for hard {0,1} labels).
        log_o = jnp.maximum(jnp.log(o), -100.0)
        log_1mo = jnp.maximum(jnp.log(1.0 - o), -100.0)
        bce = -(y * log_o + (1.0 - y) * log_1mo)

        # d = sharp(o) - o  (algebraically simplified sharpening)
        d = jnp.where(o > threshold, 1.0 - o, -o) * inv_temperature
        cons_d = (oc - o) - d                     # oc - sharp(o)
        per_elem = bce + d * d + cons_d * cons_d

        # Factored {0,1} masks applied as selects (NOT multiplies) so undefined
        # data in the out-of-bounds tail of edge tiles can never produce NaN*0.
        masked = jnp.where(bm_ref[...] > 0.0, per_elem, 0.0)   # (tb,1) -> rows
        masked = jnp.where(cm_ref[...] > 0.0, masked, 0.0)     # (1,tc) -> cols

        # Pure VPU accumulation into an (8, tc) vector accumulator: static,
        # tile-aligned sublane-group slices, no per-tile cross-lane reduce and no
        # scalar round trip through SMEM.
        acc = acc_ref[...]
        for rg in range(tb // 8):
            acc = acc + masked[rg * 8:(rg + 1) * 8, :]
        acc_ref[...] = acc

    # At this core slice's last grid step, fold lane groups into one lane-dense
    # (8, 128) block and store it with a single unmasked write.
    @pl.when((i == pl.num_programs(1) - 1) & (j == pl.num_programs(2) - 1))
    def _finalize():
        acc = acc_ref[...]
        out = acc[:, 0:_OUT_LANE]
        for cg in range(1, tc // _OUT_LANE):
            out = out + acc[:, cg * _OUT_LANE:(cg + 1) * _OUT_LANE]
        out_ref[...] = out


def semi_loss(output, output_consistency, label, batch_mask, class_mask,
              threshold=0.5, temperature=4.0):
    """Pallas-backed SemiLoss.

    output, output_consistency, label: (B, C) float32
    batch_mask: (B,) {0,1}  (source[b] in target_source)
    class_mask: (C,) {0,1}  (c in [label_mapping[x] for x in class_interests])
    """
    output = jnp.asarray(output, jnp.float32)
    output_consistency = jnp.asarray(output_consistency, jnp.float32)
    label = jnp.asarray(label, jnp.float32)
    batch_mask = jnp.asarray(batch_mask, jnp.float32)
    class_mask = jnp.asarray(class_mask, jnp.float32)

    B, C = output.shape
    split = _core_split()

    # ---- tile sizing: lane-dense classes, sublane-tiled batch, NO data padding ----
    tc = min(_round_up(C, _OUT_LANE), 512)
    nbc = _cdiv(C, tc)
    tb = min(512, _round_up(B, 8))
    n_rb = _cdiv(B, tb)                  # real row blocks over the un-padded input
    nbr = _cdiv(n_rb, split)             # row blocks per core slice
    slots = split * nbr

    # Only the tiny factored masks are padded (with zeros); zero mask entries are
    # what neutralises the undefined tails of edge data tiles inside the kernel.
    bm_pad = jnp.pad(batch_mask, (0, n_rb * tb - B))
    cm_pad = jnp.pad(class_mask, (0, nbc * tc - C))
    bm_col = bm_pad.reshape(n_rb * tb, 1)
    cm_row = cm_pad.reshape(1, nbc * tc)

    # Scalar-prefetch tables: per-row-block activity flag + DMA remap table.
    # Inactive / out-of-range blocks are remapped to the last active block index
    # so consecutive inactive blocks reuse an already-fetched tile (DMA skipped).
    blk_any = bm_pad.reshape(n_rb, tb).max(axis=1) > 0.0
    blk_any = jnp.pad(blk_any, (0, slots - n_rb))          # padded slots inactive
    active = blk_any.astype(jnp.int32)
    ids = jnp.arange(slots, dtype=jnp.int32)
    last_active = jax.lax.cummax(jnp.where(blk_any, ids, -1), axis=0)
    first_active = jnp.argmax(blk_any).astype(jnp.int32)   # 0 if nothing active
    remap = jnp.where(last_active >= 0, last_active, first_active).astype(jnp.int32)

    kernel = functools.partial(
        _semi_loss_kernel,
        threshold=float(threshold),
        inv_temperature=1.0 / float(temperature),
        nbr=nbr, tb=tb, tc=tc,
    )

    def data_map(core, i, j, act, rmp):
        return (rmp[core * nbr + i], j)

    def bm_map(core, i, j, act, rmp):
        return (rmp[core * nbr + i], 0)

    def cm_map(core, i, j, act, rmp):
        return (0, j)

    def out_map(core, i, j, act, rmp):
        return (core, 0)

    partials = pl.pallas_call(
        kernel,
        out_shape=jax.ShapeDtypeStruct((split * _OUT_SUB, _OUT_LANE), jnp.float32),
        grid_spec=pltpu.PrefetchScalarGridSpec(
            num_scalar_prefetch=2,
            grid=(split, nbr, nbc),
            in_specs=[
                pl.BlockSpec((tb, tc), data_map),   # output
                pl.BlockSpec((tb, tc), data_map),   # output_consistency
                pl.BlockSpec((tb, tc), data_map),   # label
                pl.BlockSpec((tb, 1), bm_map),      # batch mask column
                pl.BlockSpec((1, tc), cm_map),      # class mask row
            ],
            out_specs=pl.BlockSpec((_OUT_SUB, _OUT_LANE), out_map),
            scratch_shapes=[pltpu.VMEM((_OUT_SUB, tc), jnp.float32)],
        ),
        compiler_params=pltpu.CompilerParams(
            dimension_semantics=("parallel", "arbitrary", "arbitrary"),
            vmem_limit_bytes=48 * 1024 * 1024,
        ),
    )(active, remap, output, output_consistency, label, bm_col, cm_row)

    # Each core slice wrote one lane-dense (8, 128) block of per-lane partial sums.
    total = jnp.sum(partials)
    # Mask is an outer product, so the selected-entry count is analytic.
    # NOTE: like the PyTorch reference, cnt == 0 yields a non-finite loss.
    cnt = jnp.sum(batch_mask) * jnp.sum(class_mask)
    return total / cnt


def _reference(output, output_consistency, label, mask,
               threshold=0.5, temperature=4.0):
    o = np.asarray(output, np.float64)
    oc = np.asarray(output_consistency, np.float64)
    y = np.asarray(label, np.float64)
    m = np.asarray(mask, np.float64)
    bce = -(y * np.maximum(np.log(o), -100.0)
            + (1.0 - y) * np.maximum(np.log(1.0 - o), -100.0))
    sharp = np.where(o > threshold, o + (1.0 - o) / temperature,
                     o - o / temperature)
    total = np.sum(m * (bce + (o - sharp) ** 2 + (oc - sharp) ** 2))
    return total / np.sum(m)


if __name__ == "__main__":
    B, C = 4, 8
    key = jax.random.PRNGKey(0)
    k1, k2, k3 = jax.random.split(key, 3)

    # Model outputs are probabilities (the module applies nn.BCELoss to them).
    output = jax.nn.sigmoid(jax.random.normal(k1, (B, C), jnp.float32))
    output_consistency = jax.nn.sigmoid(jax.random.normal(k2, (B, C), jnp.float32))
    label = jax.random.bernoulli(k3, 0.5, (B, C)).astype(jnp.float32)

    # Python-level selection metadata (host glue, not kernel work).
    label_mapping = {f"cls{i}": i for i in range(C)}
    class_interests = ["cls1", "cls3", "cls5"]        # global in the reference code
    classes = [label_mapping[c] for c in class_interests]
    source = ["A", "B", "A", "C"]                     # one tag per batch element
    target_source = ["A", "C"]

    batch_mask = np.array([1.0 if s in target_source else 0.0 for s in source],
                          dtype=np.float32)
    class_mask = np.zeros((C,), dtype=np.float32)
    class_mask[classes] = 1.0

    loss = semi_loss(output, output_consistency, label,
                     jnp.asarray(batch_mask), jnp.asarray(class_mask),
                     threshold=0.5, temperature=4.0)
    jax.block_until_ready(loss)

    dense_mask = batch_mask[:, None] * class_mask[None, :]
    ref = _reference(output, output_consistency, label, dense_mask)
    assert np.allclose(float(loss), ref, rtol=1e-5, atol=1e-5), (float(loss), ref)
    print("KERNEL_OK")
</pallas_src>

<mosaic_0001>
module attributes {stable_mosaic.version = 11 : i64} {
  func.func @_semi_loss_kernel(%arg0: i32, %arg1: i32, %arg2: i32, %arg3: memref<1xi32, #tpu.memory_space<smem>>, %arg4: memref<1xi32, #tpu.memory_space<smem>>, %arg5: memref<8x128xf32, #tpu.memory_space<vmem>>, %arg6: memref<8x128xf32, #tpu.memory_space<vmem>>, %arg7: memref<8x128xf32, #tpu.memory_space<vmem>>, %arg8: memref<8x1xf32, #tpu.memory_space<vmem>>, %arg9: memref<1x128xf32, #tpu.memory_space<vmem>>, %arg10: memref<8x128xf32, #tpu.memory_space<vmem>>, %arg11: memref<8x128xf32, #tpu.memory_space<vmem>>) attributes {dimension_semantics = [#tpu.dimension_semantics<parallel>, #tpu.dimension_semantics<arbitrary>, #tpu.dimension_semantics<arbitrary>], iteration_bounds = array<i64: 1, 1, 1>, scalar_prefetch = 2 : i64, scratch_operands = 1 : i64, tpu.core_type = #tpu.core_type<tc>, window_params = [{transform_indices = @transform_0, window_bounds = array<i64: 8, 128>}, {transform_indices = @transform_1, window_bounds = array<i64: 8, 128>}, {transform_indices = @transform_2, window_bounds = array<i64: 8, 128>}, {transform_indices = @transform_3, window_bounds = array<i64: 8, 1>}, {transform_indices = @transform_4, window_bounds = array<i64: 1, 128>}, {transform_indices = @transform_5, window_bounds = array<i64: 8, 128>}]} {
    %c1_i32 = arith.constant 1 : i32
    %0 = arith.muli %arg0, %c1_i32 : i32
    %1 = arith.addi %0, %arg1 : i32
    %c0_i32 = arith.constant 0 : i32
    %2 = arith.cmpi eq, %arg1, %c0_i32 : i32
    %c0_i32_0 = arith.constant 0 : i32
    %3 = arith.cmpi eq, %arg2, %c0_i32_0 : i32
    %4 = arith.andi %2, %3 : i1
    %5 = arith.extui %4 : i1 to i32
    %c0_i32_1 = arith.constant 0 : i32
    %6 = arith.cmpi ne, %5, %c0_i32_1 : i32
    scf.if %6 {
      %cst = arith.constant 0.000000e+00 : f32
      %17 = vector.broadcast %cst : f32 to vector<8x128xf32>
      %c0 = arith.constant 0 : index
      %c0_7 = arith.constant 0 : index
      %18 = vector.load %arg11[%c0, %c0_7] : memref<8x128xf32, #tpu.memory_space<vmem>>, vector<8x128xf32>
      tpu.vector_store %arg11[%c0, %c0_7], %17 {strides = array<i32>} : memref<8x128xf32, #tpu.memory_space<vmem>>, vector<8x128xf32>,
    } else {
    }
    %7 = arith.index_cast %1 : i32 to index
    %8 = memref.load %arg3[%7] : memref<1xi32, #tpu.memory_space<smem>>
    %c0_i32_2 = arith.constant 0 : i32
    %9 = arith.cmpi ne, %8, %c0_i32_2 : i32
    %10 = arith.extui %9 : i1 to i32
    %c0_i32_3 = arith.constant 0 : i32
    %11 = arith.cmpi ne, %10, %c0_i32_3 : i32
    scf.if %11 {
      %c0 = arith.constant 0 : index
      %c0_7 = arith.constant 0 : index
      %17 = vector.load %arg5[%c0, %c0_7] : memref<8x128xf32, #tpu.memory_space<vmem>>, vector<8x128xf32>
      %c0_8 = arith.constant 0 : index
      %c0_9 = arith.constant 0 : index
      %18 = vector.load %arg6[%c0_8, %c0_9] : memref<8x128xf32, #tpu.memory_space<vmem>>, vector<8x128xf32>
      %c0_10 = arith.constant 0 : index
      %c0_11 = arith.constant 0 : index
      %19 = vector.load %arg7[%c0_10, %c0_11] : memref<8x128xf32, #tpu.memory_space<vmem>>, vector<8x128xf32>
      %20 = math.log %17 : vector<8x128xf32>
      %cst = arith.constant -1.000000e+02 : f32
      %21 = vector.broadcast %cst : f32 to vector<8x128xf32>
      %22 = arith.maximumf %20, %21 : vector<8x128xf32>
      %cst_12 = arith.constant 1.000000e+00 : f32
      %23 = vector.broadcast %cst_12 : f32 to vector<8x128xf32>
      %24 = arith.subf %23, %17 : vector<8x128xf32>
      %25 = math.log %24 : vector<8x128xf32>
      %cst_13 = arith.constant -1.000000e+02 : f32
      %26 = vector.broadcast %cst_13 : f32 to vector<8x128xf32>
      %27 = arith.maximumf %25, %26 : vector<8x128xf32>
      %28 = arith.mulf %19, %22 : vector<8x128xf32>
      %cst_14 = arith.constant 1.000000e+00 : f32
      %29 = vector.broadcast %cst_14 : f32 to vector<8x128xf32>
      %30 = arith.subf %29, %19 : vector<8x128xf32>
      %31 = arith.mulf %30, %27 : vector<8x128xf32>
      %32 = arith.addf %28, %31 : vector<8x128xf32>
      %cst_15 = arith.constant 0.000000e+00 : f32
      %33 = vector.broadcast %cst_15 : f32 to vector<8x128xf32>
      %34 = arith.subf %33, %32 : vector<8x128xf32>
      %cst_16 = arith.constant 5.000000e-01 : f32
      %35 = vector.broadcast %cst_16 : f32 to vector<8x128xf32>
      %36 = arith.cmpf ogt, %17, %35 : vector<8x128xf32>
      %cst_17 = arith.constant 1.000000e+00 : f32
      %37 = vector.broadcast %cst_17 : f32 to vector<8x128xf32>
      %38 = arith.subf %37, %17 : vector<8x128xf32>
      %cst_18 = arith.constant 0.000000e+00 : f32
      %39 = vector.broadcast %cst_18 : f32 to vector<8x128xf32>
      %40 = arith.subf %39, %17 : vector<8x128xf32>
      %41 = arith.select %36, %38, %40 : vector<8x128xi1>, vector<8x128xf32>
      %cst_19 = arith.constant 2.500000e-01 : f32
      %42 = vector.broadcast %cst_19 : f32 to vector<8x128xf32>
      %43 = arith.mulf %41, %42 : vector<8x128xf32>
      %44 = arith.subf %18, %17 : vector<8x128xf32>
      %45 = arith.subf %44, %43 : vector<8x128xf32>
      %46 = arith.mulf %43, %43 : vector<8x128xf32>
      %47 = arith.addf %34, %46 : vector<8x128xf32>
      %48 = arith.mulf %45, %45 : vector<8x128xf32>
      %49 = arith.addf %47, %48 : vector<8x128xf32>
      %c0_20 = arith.constant 0 : index
      %c0_21 = arith.constant 0 : index
      %50 = vector.load %arg8[%c0_20, %c0_21] : memref<8x1xf32, #tpu.memory_space<vmem>>, vector<8x1xf32>
      %cst_22 = arith.constant 0.000000e+00 : f32
      %51 = vector.broadcast %cst_22 : f32 to vector<8x1xf32>
      %52 = arith.cmpf ogt, %50, %51 : vector<8x1xf32>
      %cst_23 = arith.constant 0.000000e+00 : f32
      %53 = vector.shape_cast %52 : vector<8x1xi1> to vector<8x1xi1>
      %54 = vector.broadcast %53 : vector<8x1xi1> to vector<8x128xi1>
      %55 = vector.broadcast %cst_23 : f32 to vector<8x128xf32>
      %56 = arith.select %54, %49, %55 : vector<8x128xi1>, vector<8x128xf32>
      %c0_24 = arith.constant 0 : index
      %c0_25 = arith.constant 0 : index
      %57 = vector.load %arg9[%c0_24, %c0_25] : memref<1x128xf32, #tpu.memory_space<vmem>>, vector<1x128xf32>
      %cst_26 = arith.constant 0.000000e+00 : f32
      %58 = vector.broadcast %cst_26 : f32 to vector<1x128xf32>
      %59 = arith.cmpf ogt, %57, %58 : vector<1x128xf32>
      %cst_27 = arith.constant 0.000000e+00 : f32
      %60 = vector.shape_cast %59 : vector<1x128xi1> to vector<1x128xi1>
      %61 = vector.broadcast %60 : vector<1x128xi1> to vector<8x128xi1>
      %62 = vector.broadcast %cst_27 : f32 to vector<8x128xf32>
      %63 = arith.select %61, %56, %62 : vector<8x128xi1>, vector<8x128xf32>
      %c0_28 = arith.constant 0 : index
      %c0_29 = arith.constant 0 : index
      %64 = vector.load %arg11[%c0_28, %c0_29] : memref<8x128xf32, #tpu.memory_space<vmem>>, vector<8x128xf32>
      %65 = arith.addf %64, %63 : vector<8x128xf32>
      %c0_30 = arith.constant 0 : index
      %c0_31 = arith.constant 0 : index
      %66 = vector.load %arg11[%c0_30, %c0_31] : memref<8x128xf32, #tpu.memory_space<vmem>>, vector<8x128xf32>
      tpu.vector_store %arg11[%c0_30, %c0_31], %65 {strides = array<i32>} : memref<8x128xf32, #tpu.memory_space<vmem>>, vector<8x128xf32>,
    } else {
    }
    %c0_i32_4 = arith.constant 0 : i32
    %12 = arith.cmpi eq, %arg1, %c0_i32_4 : i32
    %c0_i32_5 = arith.constant 0 : i32
    %13 = arith.cmpi eq, %arg2, %c0_i32_5 : i32
    %14 = arith.andi %12, %13 : i1
    %15 = arith.extui %14 : i1 to i32
    %c0_i32_6 = arith.constant 0 : i32
    %16 = arith.cmpi ne, %15, %c0_i32_6 : i32
    scf.if %16 {
      %c0 = arith.constant 0 : index
      %c0_7 = arith.constant 0 : index
      %17 = vector.load %arg11[%c0, %c0_7] : memref<8x128xf32, #tpu.memory_space<vmem>>, vector<8x128xf32>
      %c0_8 = arith.constant 0 : index
      %c0_9 = arith.constant 0 : index
      %18 = vector.load %arg10[%c0_8, %c0_9] : memref<8x128xf32, #tpu.memory_space<vmem>>, vector<8x128xf32>
      tpu.vector_store %arg10[%c0_8, %c0_9], %17 {strides = array<i32>} : memref<8x128xf32, #tpu.memory_space<vmem>>, vector<8x128xf32>,
    } else {
    }
    return
  }
  func.func @transform_0(%arg0: i32, %arg1: i32, %arg2: i32, %arg3: memref<1xi32, #tpu.memory_space<smem>>, %arg4: memref<1xi32, #tpu.memory_space<smem>>) -> (i32, i32) {
    %c1_i32 = arith.constant 1 : i32
    %0 = arith.muli %arg0, %c1_i32 : i32
    %1 = arith.addi %0, %arg1 : i32
    %2 = arith.index_cast %1 : i32 to index
    %3 = memref.load %arg4[%2] : memref<1xi32, #tpu.memory_space<smem>>
    %c0_i32 = arith.constant 0 : i32
    return %3, %arg2 : i32, i32
  }
  func.func @transform_1(%arg0: i32, %arg1: i32, %arg2: i32, %arg3: memref<1xi32, #tpu.memory_space<smem>>, %arg4: memref<1xi32, #tpu.memory_space<smem>>) -> (i32, i32) {
    %c1_i32 = arith.constant 1 : i32
    %0 = arith.muli %arg0, %c1_i32 : i32
    %1 = arith.addi %0, %arg1 : i32
    %2 = arith.index_cast %1 : i32 to index
    %3 = memref.load %arg4[%2] : memref<1xi32, #tpu.memory_space<smem>>
    %c0_i32 = arith.constant 0 : i32
    return %3, %arg2 : i32, i32
  }
  func.func @transform_2(%arg0: i32, %arg1: i32, %arg2: i32, %arg3: memref<1xi32, #tpu.memory_space<smem>>, %arg4: memref<1xi32, #tpu.memory_space<smem>>) -> (i32, i32) {
    %c1_i32 = arith.constant 1 : i32
    %0 = arith.muli %arg0, %c1_i32 : i32
    %1 = arith.addi %0, %arg1 : i32
    %2 = arith.index_cast %1 : i32 to index
    %3 = memref.load %arg4[%2] : memref<1xi32, #tpu.memory_space<smem>>
    %c0_i32 = arith.constant 0 : i32
    return %3, %arg2 : i32, i32
  }
  func.func @transform_3(%arg0: i32, %arg1: i32, %arg2: i32, %arg3: memref<1xi32, #tpu.memory_space<smem>>, %arg4: memref<1xi32, #tpu.memory_space<smem>>) -> (i32, i32) {
    %c1_i32 = arith.constant 1 : i32
    %0 = arith.muli %arg0, %c1_i32 : i32
    %1 = arith.addi %0, %arg1 : i32
    %2 = arith.index_cast %1 : i32 to index
    %3 = memref.load %arg4[%2] : memref<1xi32, #tpu.memory_space<smem>>
    %c0_i32 = arith.constant 0 : i32
    %c0_i32_0 = arith.constant 0 : i32
    return %3, %c0_i32 : i32, i32
  }
  func.func @transform_4(%arg0: i32, %arg1: i32, %arg2: i32, %arg3: memref<1xi32, #tpu.memory_space<smem>>, %arg4: memref<1xi32, #tpu.memory_space<smem>>) -> (i32, i32) {
    %c0_i32 = arith.constant 0 : i32
    %c0_i32_0 = arith.constant 0 : i32
    return %c0_i32, %arg2 : i32, i32
  }
  func.func @transform_5(%arg0: i32, %arg1: i32, %arg2: i32, %arg3: memref<1xi32, #tpu.memory_space<smem>>, %arg4: memref<1xi32, #tpu.memory_space<smem>>) -> (i32, i32) {
    %c0_i32 = arith.constant 0 : i32
    %c0_i32_0 = arith.constant 0 : i32
    return %arg0, %c0_i32 : i32, i32
  }
}

</mosaic_0001>

<llo_original>
// kernel: tpu_custom_call.1
$region0: #{tpu_custom_call.1}
  #allocation0 [shape = 'u32[]', space=smem, size = 0x4, offset = 0x4, fixed_abs, tag = 'smem constant byte address 0x4 - core index']
  #allocation1 [shape = 'u32[144,128]{1,0:T(1,128)}', space=vmem, size = 0x12000, scoped, tag = 'internal scratch']
  #allocation2 [shape = 'f32[8,128]{1,0:T(8,128)}', space=vmem, size = 0x1000, scoped, tag = 'scratch operand']
  #allocation3 [shape = 's32[1]{0}', space=sflag, size = 0x4, scoped, tag = 'scoped memory for tpu_custom_call.1']
  #allocation4 [shape = 's32[1]{0:T(128)S(6)}', space=smem, size = 0x200, scoped, tag = 'prefetched SMEM operand 0']
  #allocation5 [shape = 's32[1]{0:T(128)S(6)}', space=smem, size = 0x200, scoped, tag = 'prefetched SMEM operand 1']
  %s0 = inlined_call_operand.<no memory space> [shape: s32[1], index: 0, kind: input, shape index: {}]
  %s1 = inlined_call_operand.<no memory space> [shape: s32[1], index: 1, kind: input, shape index: {}]
  %s2 = inlined_call_operand.vmem [shape: f32[4,8], index: 2, kind: input, shape index: {}]
  %s3 = inlined_call_operand.vmem [shape: f32[4,8], index: 3, kind: input, shape index: {}]
  %s4 = inlined_call_operand.vmem [shape: f32[4,8], index: 4, kind: input, shape index: {}]
  %s5 = inlined_call_operand.vmem [shape: f32[8,1], index: 5, kind: input, shape index: {}]
  %s6 = inlined_call_operand.vmem [shape: f32[1,128], index: 6, kind: input, shape index: {}]
  %s7 = inlined_call_operand.hbm [shape: f32[8,128], index: 7, kind: output, shape index: {}]
  %s8 = sld [smem:[#allocation0]]
  $region42: #{tpu_custom_call.1} parent=0
    _
  %s10 = ssub.s32 1, %s8
  %s11 = scalar_select 0, %s10, %s8
  %12 = sst [smem:[#allocation4]] %s0
  %13 = sst [smem:[#allocation5]] %s1
  $region1: #{tpu_custom_call.1} parent=0
    #allocation6 [shape = 'u8[4096]{0}', space=vmem, size = 0x1000, scoped, tag = 'output window, operand 0, single buffered']
    #allocation7 [shape = 's32[1]{0}', space=sflag, size = 0x4, scoped, tag = 'scoped memory for tpu_custom_call.1']
    %14 = vsyncpa [#allocation7], 0
    // Predicated region
    $region2: #{tpu_custom_call.1} parent=1 // pred_check
      _
    $region3: #{tpu_custom_call.1} parent=1 // pred_check_branch
      %16 = sbr.rel (0) target = $region5
    $region4: #{tpu_custom_call.1} parent=1 // pred_region
      %s17 = sadd.s32 0, 0
      %s18 = sld [smem:[#allocation5 + %s17]]
      %s19 = smul.u32 2, %s18
      %s20 = ssub.s32 1, %s19
      %s21 = smul.u32 64, %s20
      %p22 = scmp.lt.s32.totalorder %s19, 0
      %s23 = scalar_select %p22, %s19, 0
      %s24 = smul.addr %s23, 4
      %s25 = scalar_lea.vmem %s2, %s24
      %s26 = sadd.s32 0, 0
      %s27 = sld [smem:[#allocation5 + %s26]]
      %s28 = smul.u32 2, %s27
      %s29 = ssub.s32 1, %s28
      %s30 = smul.u32 64, %s29
    $region5: #{tpu_custom_call.1} parent=1 // pred_fallthru
      _
    // Predicated region
    $region6: #{tpu_custom_call.1} parent=1 // pred_check
      _
    $region7: #{tpu_custom_call.1} parent=1 // pred_check_branch
      %32 = sbr.rel (0) target = $region9
    $region8: #{tpu_custom_call.1} parent=1 // pred_region
      %s33 = sadd.s32 0, 0
      %s34 = sld [smem:[#allocation5 + %s33]]
      %s35 = smul.u32 2, %s34
      %s36 = ssub.s32 1, %s35
      %s37 = smul.u32 64, %s36
      %p38 = scmp.lt.s32.totalorder %s35, 0
      %s39 = scalar_select %p38, %s35, 0
      %s40 = smul.addr %s39, 4
      %s41 = scalar_lea.vmem %s3, %s40
      %s42 = sadd.s32 0, 0
      %s43 = sld [smem:[#allocation5 + %s42]]
      %s44 = smul.u32 2, %s43
      %s45 = ssub.s32 1, %s44
      %s46 = smul.u32 64, %s45
    $region9: #{tpu_custom_call.1} parent=1 // pred_fallthru
      _
    // Predicated region
    $region10: #{tpu_custom_call.1} parent=1 // pred_check
      _
    $region11: #{tpu_custom_call.1} parent=1 // pred_check_branch
      %48 = sbr.rel (0) target = $region13
    $region12: #{tpu_custom_call.1} parent=1 // pred_region
      %s49 = sadd.s32 0, 0
      %s50 = sld [smem:[#allocation5 + %s49]]
      %s51 = smul.u32 2, %s50
      %s52 = ssub.s32 1, %s51
      %s53 = smul.u32 64, %s52
      %p54 = scmp.lt.s32.totalorder %s51, 0
      %s55 = scalar_select %p54, %s51, 0
      %s56 = smul.addr %s55, 4
      %s57 = scalar_lea.vmem %s4, %s56
      %s58 = sadd.s32 0, 0
      %s59 = sld [smem:[#allocation5 + %s58]]
      %s60 = smul.u32 2, %s59
      %s61 = ssub.s32 1, %s60
      %s62 = smul.u32 64, %s61
    $region13: #{tpu_custom_call.1} parent=1 // pred_fallthru
      _
    // Predicated region
    $region14: #{tpu_custom_call.1} parent=1 // pred_check
      _
    $region15: #{tpu_custom_call.1} parent=1 // pred_check_branch
      %64 = sbr.rel (0) target = $region17
    $region16: #{tpu_custom_call.1} parent=1 // pred_region
      %s65 = sadd.s32 0, 0
      %s66 = sld [smem:[#allocation5 + %s65]]
      %p67 = scmp.lt.s32.totalorder %s66, 0
      %s68 = scalar_select %p67, %s66, 0
      %s69 = smul.addr %s68, 8
      %s70 = scalar_lea.vmem %s5, %s69
      %s71 = sadd.s32 0, 0
      %s72 = sld [smem:[#allocation5 + %s71]]
    $region17: #{tpu_custom_call.1} parent=1 // pred_fallthru
      _
    // Predicated region
    $region18: #{tpu_custom_call.1} parent=1 // pred_check
      _
    $region19: #{tpu_custom_call.1} parent=1 // pred_check_branch
      %74 = sbr.rel (0) target = $region21
    $region20: #{tpu_custom_call.1} parent=1 // pred_region
      _
    $region21: #{tpu_custom_call.1} parent=1 // pred_fallthru
      _
    %s75 = sadd.s32 0, 0
    %s76 = sld [smem:[#allocation5 + %s75]]
    %s77 = smul.u32 2, %s76
    %s78 = ssub.s32 1, %s77
    %s79 = smul.u32 64, %s78
    %p80 = scmp.lt.s32.totalorder %s77, 0
    %s81 = scalar_select %p80, %s77, 0
    %s82 = smul.addr %s81, 4
    %s83 = scalar_lea.vmem %s2, %s82
    %s84 = sadd.s32 0, 0
    %s85 = sld [smem:[#allocation5 + %s84]]
    %s86 = smul.u32 2, %s85
    %s87 = ssub.s32 1, %s86
    %s88 = smul.u32 64, %s87
    %p89 = scmp.lt.s32.totalorder %s86, 0
    %s90 = scalar_select %p89, %s86, 0
    %s91 = smul.addr %s90, 4
    %s92 = scalar_lea.vmem %s3, %s91
    %s93 = sadd.s32 0, 0
    %s94 = sld [smem:[#allocation5 + %s93]]
    %s95 = smul.u32 2, %s94
    %s96 = ssub.s32 1, %s95
    %s97 = smul.u32 64, %s96
    %p98 = scmp.lt.s32.totalorder %s95, 0
    %s99 = scalar_select %p98, %s95, 0
    %s100 = smul.addr %s99, 4
    %s101 = scalar_lea.vmem %s4, %s100
    %s102 = sadd.s32 0, 0
    %s103 = sld [smem:[#allocation5 + %s102]]
    %p104 = scmp.lt.s32.totalorder %s103, 0
    %s105 = scalar_select %p104, %s103, 0
    %s106 = smul.addr %s105, 8
    %s107 = scalar_lea.vmem %s5, %s106
    %s108 = sadd.s32 0, 0
    %s109 = sld [smem:[#allocation5 + %s108]]
    %s110 = smul.u32 2, %s109
    %s111 = ssub.s32 1, %s110
    %s112 = smul.u32 64, %s111
    %p113 = scmp.lt.s32.totalorder %s110, 0
    %s114 = scalar_select %p113, %s110, 0
    %s115 = smul.addr %s114, 4
    %s116 = scalar_lea.vmem %s2, %s115
    %s117 = sadd.s32 0, 0
    %s118 = sld [smem:[#allocation5 + %s117]]
    %s119 = smul.u32 2, %s118
    %s120 = ssub.s32 1, %s119
    %s121 = smul.u32 64, %s120
    %s122 = sadd.s32 0, 0
    %s123 = sld [smem:[#allocation5 + %s122]]
    %s124 = smul.u32 2, %s123
    %s125 = ssub.s32 1, %s124
    %s126 = smul.u32 64, %s125
    %p127 = scmp.lt.s32.totalorder %s124, 0
    %s128 = scalar_select %p127, %s124, 0
    %s129 = smul.addr %s128, 4
    %s130 = scalar_lea.vmem %s3, %s129
    %s131 = sadd.s32 0, 0
    %s132 = sld [smem:[#allocation5 + %s131]]
    %s133 = smul.u32 2, %s132
    %s134 = ssub.s32 1, %s133
    %s135 = smul.u32 64, %s134
    %s136 = sadd.s32 0, 0
    %s137 = sld [smem:[#allocation5 + %s136]]
    %s138 = smul.u32 2, %s137
    %s139 = ssub.s32 1, %s138
    %s140 = smul.u32 64, %s139
    %p141 = scmp.lt.s32.totalorder %s138, 0
    %s142 = scalar_select %p141, %s138, 0
    %s143 = smul.addr %s142, 4
    %s144 = scalar_lea.vmem %s4, %s143
    %s145 = sadd.s32 0, 0
    %s146 = sld [smem:[#allocation5 + %s145]]
    %s147 = smul.u32 2, %s146
    %s148 = ssub.s32 1, %s147
    %s149 = smul.u32 64, %s148
    %s150 = sadd.s32 0, 0
    %s151 = sld [smem:[#allocation5 + %s150]]
    %p152 = scmp.lt.s32.totalorder %s151, 0
    %s153 = scalar_select %p152, %s151, 0
    %s154 = smul.addr %s153, 8
    %s155 = scalar_lea.vmem %s5, %s154
    %s156 = sadd.s32 0, 0
    %s157 = sld [smem:[#allocation5 + %s156]]
    %s158 = sadd.s32 0, 0
    %p159 = scmp.eq.s32.totalorder 0, 0
    %p160 = scmp.eq.s32.totalorder 0, 0
    %p161 = pnand %p159, %p160
    %p162 = pneg %p161
    // Predicated region
    $region22: #{tpu_custom_call.1} parent=1 // pred_check
      _
    $region23: #{tpu_custom_call.1} parent=1 // pred_check_branch
      %164 = sbr.rel (%p161) target = $region25
    $region24: #{tpu_custom_call.1} parent=1 // pred_region
      %165 = vst [vmem:[#allocation2] sm:$0xff] 0.0
    $region25: #{tpu_custom_call.1} parent=1 // pred_fallthru
      _
    %s166 = sld [smem:[#allocation4 + %s158]]
    %p167 = scmp.ne.s32.totalorder %s166, 0
    // Predicated region
    $region26: #{tpu_custom_call.1} parent=1 // pred_check
      %p168 = pneg %p167
    $region27: #{tpu_custom_call.1} parent=1 // pred_check_branch
      %170 = sbr.rel (%p168) target = $region29
    $region28: #{tpu_custom_call.1} parent=1 // pred_region
      %v171 = vld [vmem:[%s116] sm:$0xff]
      %v172 = vld [vmem:[%s130] sm:$0xff]
      %v173 = vld [vmem:[%s144] sm:$0xff]
      %v174 = vlog2.pop %v171
      %v175 = vmul.f32 %v174, 0.6931472
      %v176 = vmax.f32 %v175, -100.0
      %v177 = vsub.f32 1.0, %v171
      %v178 = vlog2.pop %v177
      %v179 = vmul.f32 %v178, 0.6931472
      %v180 = vmax.f32 %v179, -100.0
      %v181 = vmul.f32 %v173, %v176
      %v182 = vsub.f32 1.0, %v173
      %v183 = vmul.f32 %v182, %v180
      %v184 = vadd.f32 %v181, %v183
      %v185 = vsub.f32 0.0, %v184
      %vm186 = vcmp.gt.f32.partialorder %v171, 0.5
      %v187 = vsub.f32 0.0, %v171
      %v188 = vsel %vm186, %v177, %v187
      %v189 = vmul.f32 %v188, 0.25
      %v190 = vsub.f32 %v172, %v171
      %v191 = vsub.f32 %v190, %v189
      %v192 = vmul.f32 %v189, %v189
      %v193 = vadd.f32 %v185, %v192
      %v194 = vmul.f32 %v191, %v191
      %v195 = vadd.f32 %v193, %v194
      %v196 = vld [vmem:[%s155] sm:$0xff]
      %vm197 = vcmp.gt.f32.partialorder %v196, 0.0
      %v198 = vsel %vm197, 1, 0
      %199 = vset.pattern.permute.xlu0 0
      %200 = vperm.xlu0 %199, %v198
      %v201 = vpop.permute.xlu0 %200
      %vm202 = vcmp.eq.s32.totalorder %v201, 1
      %v203 = vsel %vm202, %v195, 0.0
      %v204 = vld [vmem:[%s6] sm:$0x1]
      %vm205 = vcmp.gt.f32.partialorder %v204, 0.0
      %v206 = vsel %vm205, 1, 0
      %v207 = vlaneseq
      %v208 = vshrl.u32 %v207, 7
      %v209 = vsub.s32 0, %v208
      %v210 = vrot.slane %v206, %v209
      %vm211 = vcmp.eq.s32.totalorder %v210, 1
      %v212 = vsel %vm211, %v203, 0.0
      %v213 = vld [vmem:[#allocation2] sm:$0xff]
      %v214 = vadd.f32 %v213, %v212
      %215 = vst [vmem:[#allocation2] sm:$0xff] %v214
    $region29: #{tpu_custom_call.1} parent=1 // pred_fallthru
      _
    // Predicated region
    $region30: #{tpu_custom_call.1} parent=1 // pred_check
      _
    $region31: #{tpu_custom_call.1} parent=1 // pred_check_branch
      %217 = sbr.rel (%p161) target = $region33
    $region32: #{tpu_custom_call.1} parent=1 // pred_region
      %v218 = vld [vmem:[#allocation2] sm:$0xff]
      %219 = vst [vmem:[#allocation6] sm:$0xff] %v218
    $region33: #{tpu_custom_call.1} parent=1 // pred_fallthru
      _
    // Predicated region
    $region34: #{tpu_custom_call.1} parent=1 // pred_check
      _
    $region35: #{tpu_custom_call.1} parent=1 // pred_check_branch
      %221 = sbr.rel (0) target = $region37
    $region36: #{tpu_custom_call.1} parent=1 // pred_region
      %s223 = ssub.s32 128, 128
      %224 = vsyncadd [#allocation7], %s223
      %s226 = sshll.u32 [#allocation6], 4
      %s227 = int_to_ptr.vmem [resolvable:$true] %s226
      %229 = dma.vmem_to_hbm [thread:$0]  %s227, 128, %s7, [#allocation7]
    $region37: #{tpu_custom_call.1} parent=1 // pred_fallthru
      _
    // Predicated region
    $region38: #{tpu_custom_call.1} parent=1 // pred_check
      _
    $region39: #{tpu_custom_call.1} parent=1 // pred_check_branch
      %231 = sbr.rel (0) target = $region41
    $region40: #{tpu_custom_call.1} parent=1 // pred_region
      %232 = dma.done [#allocation7], 128
    $region41: #{tpu_custom_call.1} parent=1 // pred_fallthru
      _
    %233 = vsyncpa [#allocation7], 1

</llo_original>
